<compile_context>
chip_gen: v5e
topology: v5e:2x2
jax: 0.10.0
libtpu: 0.0.40
codegen_flags: <defaults>
</compile_context>

<pallas_src>
import math

import jax
import jax.numpy as jnp
from jax.experimental import pallas as pl
from jax.experimental.pallas import tpu as pltpu


# ---------------------------------------------------------------------------
# Kernel body
# ---------------------------------------------------------------------------
def _nade_final_kernel(x_ref, w_ref, b_ref, o_ref, acc_ref):
    # x_ref  : (TB, TH, TN)  input block           (input dtype)
    # w_ref  : (TH, TN)      weights block         (input dtype)
    # b_ref  : (1, TN)       bias block
    # o_ref  : (TB, TN)      output block
    # acc_ref: (TB, TN) f32  accumulator, resident across the N_h grid axis
    ht = pl.program_id(2)

    @pl.when(ht == 0)
    def _():
        acc_ref[...] = jnp.zeros_like(acc_ref)

    # VPU multiply in the input dtype; f32 accumulation in the sublane reduce.
    acc_ref[...] += jnp.sum(x_ref[...] * w_ref[...], axis=1, dtype=jnp.float32)

    @pl.when(ht == pl.num_programs(2) - 1)
    def _():
        o_ref[...] = (
            acc_ref[...] + b_ref[...].astype(jnp.float32)
        ).astype(o_ref.dtype)


# ---------------------------------------------------------------------------
# Tile selection
# ---------------------------------------------------------------------------
def _pick_tile(full, target, multiple):
    """Largest divisor of `full` that is a multiple of `multiple` and <= target.
    Callers guarantee `full % multiple == 0` (via wrapper padding), so the loop
    always terminates with at least `multiple`."""
    if full <= target:
        return full
    t = (target // multiple) * multiple
    while t >= multiple:
        if full % t == 0:
            return t
        t -= multiple
    return full  # defensive fallback (not reached when full % multiple == 0)


def _choose_tiles(B, N_h, N, itemsize, vmem_budget):
    """Pick (TB, TH, TN).  B is a multiple of the dtype sublane quantum and N a
    multiple of 128 (padded by the caller).  TH is either the full N_h or a
    multiple-of-8 divisor of it (both are legal sublane block sizes)."""
    qb = max(8, 32 // itemsize)            # dtype-aware sublane quantum for TB
    target_x_bytes = 6 * 1024 * 1024       # ~6 MiB x block (4-8 MiB sweet spot)

    def working_set(tb, th, tn):
        # double-buffered x / weights / bias / out blocks + resident f32 acc
        return (2 * (tb * th * tn + th * tn + tn + tb * tn) * itemsize
                + tb * tn * 4)

    tn_cands = [t for t in range(min((N // 128) * 128, 2048), 0, -128)
                if N % t == 0] or [N]
    th_cands = [N_h] + sorted(
        {t for t in range(8, N_h, 8) if N_h % t == 0}, reverse=True)

    for tn in tn_cands:
        for th in th_cands:
            tb_cap = max(qb,
                         (target_x_bytes // max(1, th * tn * itemsize))
                         // qb * qb)
            tb = _pick_tile(B, tb_cap, qb)
            # Megacore (v7x): keep >= 2 shardable tiles when N fits one tile.
            if N // tn <= 1 and B >= 2 * qb:
                while B // tb < 2 and tb > qb:
                    tb = _pick_tile(B, max(qb, tb - qb), qb)
            # Shrink the batch tile until the working set fits the VMEM budget.
            while tb > qb and working_set(tb, th, tn) > vmem_budget:
                tb = _pick_tile(B, max(qb, tb - qb), qb)
            if working_set(tb, th, tn) <= vmem_budget:
                return tb, th, tn
    # Last resort: smallest legal tiles (e.g. very large N_h with no divisor).
    return _pick_tile(B, qb, qb), th_cands[-1], tn_cands[-1]


# ---------------------------------------------------------------------------
# Wrapper
# ---------------------------------------------------------------------------
def nade_final_layer(x, weights, bias, *, tile_override=None):
    """x: (B, N_h, N); weights: (N_h, N); bias: (N,) -> (B, N)."""
    B, N_h, N = x.shape
    assert weights.shape == (N_h, N)
    assert bias.shape == (N,)

    dtype = x.dtype
    itemsize = jnp.dtype(dtype).itemsize
    qb = max(8, 32 // itemsize)            # dtype-aware sublane quantum

    # Pad ragged shapes (zero padding is exact for this op); slice output back.
    b_pad = (-B) % qb
    n_pad = (-N) % 128
    if b_pad or n_pad:
        x = jnp.pad(x, ((0, b_pad), (0, 0), (0, n_pad)))
        weights = jnp.pad(weights, ((0, 0), (0, n_pad)))
        bias = jnp.pad(bias, ((0, n_pad),))
    Bp, Np = B + b_pad, N + n_pad

    vmem_limit = 48 * 1024 * 1024          # headroom under v7x's 64 MiB VMEM
    if tile_override is not None:
        TB, TH, TN = tile_override
    else:
        TB, TH, TN = _choose_tiles(Bp, N_h, Np, itemsize, (vmem_limit * 3) // 4)

    n_tiles = Np // TN
    b_tiles = Bp // TB
    h_tiles = N_h // TH

    bias2d = bias.reshape(1, Np)

    # Grid order: (N-tile, batch-tile, N_h-tile).  N_h (reduction) is the
    # innermost axis so the output/accumulator block stays resident across it;
    # batch is the next-fastest axis so weights/bias blocks are re-fetched as
    # rarely as possible.
    grid_spec = pltpu.PrefetchScalarGridSpec(
        num_scalar_prefetch=0,
        grid=(n_tiles, b_tiles, h_tiles),
        in_specs=[
            pl.BlockSpec((TB, TH, TN), lambda nt, bt, ht: (bt, ht, nt)),
            pl.BlockSpec((TH, TN), lambda nt, bt, ht: (ht, nt)),
            pl.BlockSpec((1, TN), lambda nt, bt, ht: (0, nt)),
        ],
        out_specs=pl.BlockSpec((TB, TN), lambda nt, bt, ht: (bt, nt)),
        scratch_shapes=[pltpu.VMEM((TB, TN), jnp.float32)],
    )

    cost = pl.CostEstimate(
        flops=2 * B * N_h * N,
        transcendentals=0,
        bytes_accessed=itemsize * (B * N_h * N + N_h * N + B * N)
        + jnp.dtype(bias.dtype).itemsize * N,
    )

    out = pl.pallas_call(
        _nade_final_kernel,
        out_shape=jax.ShapeDtypeStruct((Bp, Np), dtype),
        grid_spec=grid_spec,
        compiler_params=pltpu.CompilerParams(
            # Data axes are independent -> megacore-shardable; the N_h
            # reduction axis must be "arbitrary".
            dimension_semantics=("parallel", "parallel", "arbitrary"),
            vmem_limit_bytes=vmem_limit,
        ),
        cost_estimate=cost,
    )(x, weights, bias2d)

    if b_pad or n_pad:
        out = out[:B, :N]
    return out


def init_params(key, N, N_h, dtype=jnp.float32):
    # PyTorch: fan_in for weights of shape (N_h, N) is N; bound = 1/sqrt(fan_in)
    bound = 1.0 / math.sqrt(N)
    kw, kb = jax.random.split(key)
    weights = jax.random.uniform(kw, (N_h, N), dtype, minval=-bound, maxval=bound)
    bias = jax.random.uniform(kb, (N,), dtype, minval=-bound, maxval=bound)
    return weights, bias


if __name__ == "__main__":
    key = jax.random.PRNGKey(0)

    def reference(x, w, b):
        return jnp.sum(x * w[None, :, :], axis=1) + b[None, :]

    # --- Test 1: aligned shapes (single tile). -----------------------------
    B, N_h, N = 8, 32, 128
    k_x, k_p, key = jax.random.split(key, 3)
    weights, bias = init_params(k_p, N, N_h)
    x = jax.random.normal(k_x, (B, N_h, N), jnp.float32)
    out = jax.block_until_ready(nade_final_layer(x, weights, bias))
    assert out.shape == (B, N)
    assert jnp.allclose(out, reference(x, weights, bias), atol=1e-5, rtol=1e-5), \
        "mismatch vs reference (aligned)"

    # --- Test 2: ragged shapes -> exercises the padding path. --------------
    B, N_h, N = 5, 12, 200
    k_x, k_p, key = jax.random.split(key, 3)
    weights, bias = init_params(k_p, N, N_h)
    x = jax.random.normal(k_x, (B, N_h, N), jnp.float32)
    out = jax.block_until_ready(nade_final_layer(x, weights, bias))
    assert out.shape == (B, N)
    assert jnp.allclose(out, reference(x, weights, bias), atol=1e-5, rtol=1e-5), \
        "mismatch vs reference (ragged/padded)"

    # --- Test 3: multi-tile grid incl. the N_h reduction axis (forced). ----
    B, N_h, N = 16, 32, 256
    k_x, k_p, key = jax.random.split(key, 3)
    weights, bias = init_params(k_p, N, N_h)
    x = jax.random.normal(k_x, (B, N_h, N), jnp.float32)
    out = jax.block_until_ready(
        nade_final_layer(x, weights, bias, tile_override=(8, 8, 128)))
    assert out.shape == (B, N)
    assert jnp.allclose(out, reference(x, weights, bias), atol=1e-5, rtol=1e-5), \
        "mismatch vs reference (chunked N_h)"

    # TODO(synk): torch.cuda.empty_cache() has no TPU equivalent (allocator no-op).
    print("KERNEL_OK")
</pallas_src>

<mosaic_0001>
module attributes {stable_mosaic.version = 11 : i64} {
  func.func @_nade_final_kernel(%arg0: i32, %arg1: i32, %arg2: i32, %arg3: memref<8x32x128xf32, #tpu.memory_space<vmem>>, %arg4: memref<32x128xf32, #tpu.memory_space<vmem>>, %arg5: memref<1x128xf32, #tpu.memory_space<vmem>>, %arg6: memref<8x128xf32, #tpu.memory_space<vmem>>, %arg7: memref<8x128xf32, #tpu.memory_space<vmem>>) attributes {dimension_semantics = [#tpu.dimension_semantics<parallel>, #tpu.dimension_semantics<parallel>, #tpu.dimension_semantics<arbitrary>], iteration_bounds = array<i64: 1, 1, 1>, scalar_prefetch = 0 : i64, scratch_operands = 1 : i64, tpu.core_type = #tpu.core_type<tc>, window_params = [{transform_indices = @transform_0, window_bounds = array<i64: 8, 32, 128>}, {transform_indices = @transform_1, window_bounds = array<i64: 32, 128>}, {transform_indices = @transform_2, window_bounds = array<i64: 1, 128>}, {transform_indices = @transform_3, window_bounds = array<i64: 8, 128>}]} {
    %c0_i32 = arith.constant 0 : i32
    %0 = arith.cmpi eq, %arg2, %c0_i32 : i32
    %1 = arith.extui %0 : i1 to i32
    %c0_i32_0 = arith.constant 0 : i32
    %2 = arith.cmpi ne, %1, %c0_i32_0 : i32
    scf.if %2 {
      %cst_11 = arith.constant 0.000000e+00 : f32
      %15 = vector.broadcast %cst_11 : f32 to vector<8x128xf32>
      %c0_12 = arith.constant 0 : index
      %c0_13 = arith.constant 0 : index
      %16 = vector.load %arg7[%c0_12, %c0_13] : memref<8x128xf32, #tpu.memory_space<vmem>>, vector<8x128xf32>
      tpu.vector_store %arg7[%c0_12, %c0_13], %15 {strides = array<i32>} : memref<8x128xf32, #tpu.memory_space<vmem>>, vector<8x128xf32>,
    } else {
    }
    %c0 = arith.constant 0 : index
    %c0_1 = arith.constant 0 : index
    %3 = vector.load %arg7[%c0, %c0_1] : memref<8x128xf32, #tpu.memory_space<vmem>>, vector<8x128xf32>
    %c0_2 = arith.constant 0 : index
    %c0_3 = arith.constant 0 : index
    %c0_4 = arith.constant 0 : index
    %4 = vector.load %arg3[%c0_2, %c0_3, %c0_4] : memref<8x32x128xf32, #tpu.memory_space<vmem>>, vector<8x32x128xf32>
    %c0_5 = arith.constant 0 : index
    %c0_6 = arith.constant 0 : index
    %5 = vector.load %arg4[%c0_5, %c0_6] : memref<32x128xf32, #tpu.memory_space<vmem>>, vector<32x128xf32>
    %6 = vector.shape_cast %5 : vector<32x128xf32> to vector<1x32x128xf32>
    %7 = vector.broadcast %6 : vector<1x32x128xf32> to vector<8x32x128xf32>
    %8 = arith.mulf %4, %7 : vector<8x32x128xf32>
    %cst = arith.constant dense<0.000000e+00> : vector<8x128xf32>
    %9 = vector.multi_reduction <add>, %8, %cst [1] : vector<8x32x128xf32> to vector<8x128xf32>
    %10 = arith.addf %3, %9 : vector<8x128xf32>
    %c0_7 = arith.constant 0 : index
    %c0_8 = arith.constant 0 : index
    %11 = vector.load %arg7[%c0_7, %c0_8] : memref<8x128xf32, #tpu.memory_space<vmem>>, vector<8x128xf32>
    tpu.vector_store %arg7[%c0_7, %c0_8], %10 {strides = array<i32>} : memref<8x128xf32, #tpu.memory_space<vmem>>, vector<8x128xf32>,
    %c0_i32_9 = arith.constant 0 : i32
    %12 = arith.cmpi eq, %arg2, %c0_i32_9 : i32
    %13 = arith.extui %12 : i1 to i32
    %c0_i32_10 = arith.constant 0 : i32
    %14 = arith.cmpi ne, %13, %c0_i32_10 : i32
    scf.if %14 {
      %c0_11 = arith.constant 0 : index
      %c0_12 = arith.constant 0 : index
      %15 = vector.load %arg7[%c0_11, %c0_12] : memref<8x128xf32, #tpu.memory_space<vmem>>, vector<8x128xf32>
      %c0_13 = arith.constant 0 : index
      %c0_14 = arith.constant 0 : index
      %16 = vector.load %arg5[%c0_13, %c0_14] : memref<1x128xf32, #tpu.memory_space<vmem>>, vector<1x128xf32>
      %17 = vector.broadcast %16 : vector<1x128xf32> to vector<8x128xf32>
      %18 = arith.addf %15, %17 : vector<8x128xf32>
      %c0_15 = arith.constant 0 : index
      %c0_16 = arith.constant 0 : index
      %19 = vector.load %arg6[%c0_15, %c0_16] : memref<8x128xf32, #tpu.memory_space<vmem>>, vector<8x128xf32>
      tpu.vector_store %arg6[%c0_15, %c0_16], %18 {strides = array<i32>} : memref<8x128xf32, #tpu.memory_space<vmem>>, vector<8x128xf32>,
    } else {
    }
    return
  }
  func.func @transform_0(%arg0: i32, %arg1: i32, %arg2: i32) -> (i32, i32, i32) {
    %c0_i32 = arith.constant 0 : i32
    return %arg1, %arg2, %arg0 : i32, i32, i32
  }
  func.func @transform_1(%arg0: i32, %arg1: i32, %arg2: i32) -> (i32, i32) {
    %c0_i32 = arith.constant 0 : i32
    return %arg2, %arg0 : i32, i32
  }
  func.func @transform_2(%arg0: i32, %arg1: i32, %arg2: i32) -> (i32, i32) {
    %c0_i32 = arith.constant 0 : i32
    %c0_i32_0 = arith.constant 0 : i32
    return %c0_i32, %arg0 : i32, i32
  }
  func.func @transform_3(%arg0: i32, %arg1: i32, %arg2: i32) -> (i32, i32) {
    %c0_i32 = arith.constant 0 : i32
    return %arg1, %arg0 : i32, i32
  }
}

</mosaic_0001>

<llo_original>
// kernel: tpu_custom_call.1
$region0: #{tpu_custom_call.1}
  #allocation0 [shape = 'u32[]', space=smem, size = 0x4, offset = 0x4, fixed_abs, tag = 'smem constant byte address 0x4 - core index']
  #allocation1 [shape = 'u32[72,128]{1,0:T(1,128)}', space=vmem, size = 0x9000, scoped, tag = 'internal scratch']
  #allocation2 [shape = 'f32[8,128]{1,0:T(8,128)}', space=vmem, size = 0x1000, scoped, tag = 'scratch operand']
  %s0 = inlined_call_operand.hbm [shape: f32[8,32,128], index: 0, kind: input, shape index: {}]
  %s1 = inlined_call_operand.hbm [shape: f32[32,128], index: 1, kind: input, shape index: {}]
  %s2 = inlined_call_operand.vmem [shape: f32[1,128], index: 2, kind: input, shape index: {}]
  %s3 = inlined_call_operand.hbm [shape: f32[8,128], index: 3, kind: output, shape index: {}]
  %s4 = sld [smem:[#allocation0]]
  $region38: #{tpu_custom_call.1} parent=0
    _
  %s6 = ssub.s32 1, %s4
  %s7 = scalar_select 0, %s6, %s4
  $region1: #{tpu_custom_call.1} parent=0
    #allocation3 [shape = 'u8[131072]{0}', space=vmem, size = 0x20000, scoped, tag = 'input window, operand 0, single buffered']
    #allocation4 [shape = 's32[1]{0}', space=sflag, size = 0x4, scoped, tag = 'scoped memory for tpu_custom_call.1']
    #allocation5 [shape = 's32[1]{0}', space=sflag, size = 0x4, scoped, tag = 'scoped memory for tpu_custom_call.1']
    #allocation6 [shape = 'u8[16384]{0}', space=vmem, size = 0x4000, scoped, tag = 'input window, operand 1, single buffered']
    #allocation7 [shape = 's32[1]{0}', space=sflag, size = 0x4, scoped, tag = 'scoped memory for tpu_custom_call.1']
    #allocation8 [shape = 'u8[4096]{0}', space=vmem, size = 0x1000, scoped, tag = 'output window, operand 0, single buffered']
    %8 = vsyncpa [#allocation4], 0
    %9 = vsyncpa [#allocation7], 0
    %10 = vsyncpa [#allocation5], 0
    // Predicated region
    $region2: #{tpu_custom_call.1} parent=1 // pred_check
      _
    $region3: #{tpu_custom_call.1} parent=1 // pred_check_branch
      %12 = sbr.rel (0) target = $region5
    $region4: #{tpu_custom_call.1} parent=1 // pred_region
      %14 = vsyncadd [#allocation4], 0
      %s15 = sshll.u32 %s0, 4
      %s16 = int_to_ptr.hbm [resolvable:$true] %s15
      %s17 = sshll.u32 [#allocation3], 4
      %s18 = int_to_ptr.vmem [resolvable:$true] %s17
      %23 = dma.hbm_to_vmem [thread:$0]  %s16, 4096, %s18, [#allocation4], 128, 128, 8
    $region5: #{tpu_custom_call.1} parent=1 // pred_fallthru
      _
    // Predicated region
    $region6: #{tpu_custom_call.1} parent=1 // pred_check
      _
    $region7: #{tpu_custom_call.1} parent=1 // pred_check_branch
      %25 = sbr.rel (0) target = $region9
    $region8: #{tpu_custom_call.1} parent=1 // pred_region
      %27 = vsyncadd [#allocation7], 0
      %s28 = sshll.u32 %s1, 4
      %s29 = int_to_ptr.hbm [resolvable:$true] %s28
      %s30 = sshll.u32 [#allocation6], 4
      %s31 = int_to_ptr.vmem [resolvable:$true] %s30
      %36 = dma.hbm_to_vmem [thread:$0]  %s29, 512, %s31, [#allocation7], 128, 128, 8
    $region9: #{tpu_custom_call.1} parent=1 // pred_fallthru
      _
    // Predicated region
    $region10: #{tpu_custom_call.1} parent=1 // pred_check
      _
    $region11: #{tpu_custom_call.1} parent=1 // pred_check_branch
      %38 = sbr.rel (0) target = $region13
    $region12: #{tpu_custom_call.1} parent=1 // pred_region
      _
    $region13: #{tpu_custom_call.1} parent=1 // pred_fallthru
      _
    // Predicated region
    $region14: #{tpu_custom_call.1} parent=1 // pred_check
      _
    $region15: #{tpu_custom_call.1} parent=1 // pred_check_branch
      %40 = sbr.rel (0) target = $region17
    $region16: #{tpu_custom_call.1} parent=1 // pred_region
      %42 = dma.done [#allocation4], 4096
    $region17: #{tpu_custom_call.1} parent=1 // pred_fallthru
      _
    // Predicated region
    $region18: #{tpu_custom_call.1} parent=1 // pred_check
      _
    $region19: #{tpu_custom_call.1} parent=1 // pred_check_branch
      %44 = sbr.rel (0) target = $region21
    $region20: #{tpu_custom_call.1} parent=1 // pred_region
      %46 = dma.done [#allocation7], 512
    $region21: #{tpu_custom_call.1} parent=1 // pred_fallthru
      _
    %p47 = scmp.eq.s32.totalorder 0, 0
    // Predicated region
    $region22: #{tpu_custom_call.1} parent=1 // pred_check
      %p48 = pneg %p47
    $region23: #{tpu_custom_call.1} parent=1 // pred_check_branch
      %50 = sbr.rel (%p48) target = $region25
    $region24: #{tpu_custom_call.1} parent=1 // pred_region
      %51 = vst [vmem:[#allocation2] sm:$0xff] 0.0
    $region25: #{tpu_custom_call.1} parent=1 // pred_fallthru
      _
    %v52 = vld [vmem:[#allocation2] sm:$0xff]
    %v53 = vld [vmem:[#allocation3] sm:$0xff]
    %v54 = vld [vmem:[#allocation3 + $0x8] sm:$0xff]
    %v55 = vld [vmem:[#allocation3 + $0x10] sm:$0xff]
    %v56 = vld [vmem:[#allocation3 + $0x18] sm:$0xff]
    %v57 = vld [vmem:[#allocation3 + $0x20] sm:$0xff]
    %v58 = vld [vmem:[#allocation3 + $0x28] sm:$0xff]
    %v59 = vld [vmem:[#allocation3 + $0x30] sm:$0xff]
    %v60 = vld [vmem:[#allocation3 + $0x38] sm:$0xff]
    %v61 = vld [vmem:[#allocation3 + $0x40] sm:$0xff]
    %v62 = vld [vmem:[#allocation3 + $0x48] sm:$0xff]
    %v63 = vld [vmem:[#allocation3 + $0x50] sm:$0xff]
    %v64 = vld [vmem:[#allocation3 + $0x58] sm:$0xff]
    %v65 = vld [vmem:[#allocation3 + $0x60] sm:$0xff]
    %v66 = vld [vmem:[#allocation3 + $0x68] sm:$0xff]
    %v67 = vld [vmem:[#allocation3 + $0x70] sm:$0xff]
    %v68 = vld [vmem:[#allocation3 + $0x78] sm:$0xff]
    %v69 = vld [vmem:[#allocation3 + $0x80] sm:$0xff]
    %v70 = vld [vmem:[#allocation3 + $0x88] sm:$0xff]
    %v71 = vld [vmem:[#allocation3 + $0x90] sm:$0xff]
    %v72 = vld [vmem:[#allocation3 + $0x98] sm:$0xff]
    %v73 = vld [vmem:[#allocation3 + $0xa0] sm:$0xff]
    %v74 = vld [vmem:[#allocation3 + $0xa8] sm:$0xff]
    %v75 = vld [vmem:[#allocation3 + $0xb0] sm:$0xff]
    %v76 = vld [vmem:[#allocation3 + $0xb8] sm:$0xff]
    %v77 = vld [vmem:[#allocation3 + $0xc0] sm:$0xff]
    %v78 = vld [vmem:[#allocation3 + $0xc8] sm:$0xff]
    %v79 = vld [vmem:[#allocation3 + $0xd0] sm:$0xff]
    %v80 = vld [vmem:[#allocation3 + $0xd8] sm:$0xff]
    %v81 = vld [vmem:[#allocation3 + $0xe0] sm:$0xff]
    %v82 = vld [vmem:[#allocation3 + $0xe8] sm:$0xff]
    %v83 = vld [vmem:[#allocation3 + $0xf0] sm:$0xff]
    %v84 = vld [vmem:[#allocation3 + $0xf8] sm:$0xff]
    %v85 = vld [vmem:[#allocation6] sm:$0xff]
    %v86 = vld [vmem:[#allocation6 + $0x8] sm:$0xff]
    %v87 = vld [vmem:[#allocation6 + $0x10] sm:$0xff]
    %v88 = vld [vmem:[#allocation6 + $0x18] sm:$0xff]
    %v89 = vmul.f32 %v53, %v85
    %v90 = vmul.f32 %v54, %v86
    %v91 = vmul.f32 %v55, %v87
    %v92 = vmul.f32 %v56, %v88
    %v93 = vmul.f32 %v57, %v85
    %v94 = vmul.f32 %v58, %v86
    %v95 = vmul.f32 %v59, %v87
    %v96 = vmul.f32 %v60, %v88
    %v97 = vmul.f32 %v61, %v85
    %v98 = vmul.f32 %v62, %v86
    %v99 = vmul.f32 %v63, %v87
    %v100 = vmul.f32 %v64, %v88
    %v101 = vmul.f32 %v65, %v85
    %v102 = vmul.f32 %v66, %v86
    %v103 = vmul.f32 %v67, %v87
    %v104 = vmul.f32 %v68, %v88
    %v105 = vmul.f32 %v69, %v85
    %v106 = vmul.f32 %v70, %v86
    %v107 = vmul.f32 %v71, %v87
    %v108 = vmul.f32 %v72, %v88
    %v109 = vmul.f32 %v73, %v85
    %v110 = vmul.f32 %v74, %v86
    %v111 = vmul.f32 %v75, %v87
    %v112 = vmul.f32 %v76, %v88
    %v113 = vmul.f32 %v77, %v85
    %v114 = vmul.f32 %v78, %v86
    %v115 = vmul.f32 %v79, %v87
    %v116 = vmul.f32 %v80, %v88
    %v117 = vmul.f32 %v81, %v85
    %v118 = vmul.f32 %v82, %v86
    %v119 = vmul.f32 %v83, %v87
    %v120 = vmul.f32 %v84, %v88
    %v121 = vadd.f32 %v89, %v90
    %v122 = vadd.f32 %v121, %v91
    %v123 = vadd.f32 %v122, %v92
    %v124 = vrot.slane %v123, 4
    %v125 = vadd.f32 %v123, %v124
    %v126 = vrot.slane %v125, 2
    %v127 = vadd.f32 %v125, %v126
    %v128 = vrot.slane %v127, 1
    %v129 = vadd.f32 %v127, %v128
    %v130 = vadd.f32 %v93, %v94
    %v131 = vadd.f32 %v130, %v95
    %v132 = vadd.f32 %v131, %v96
    %v133 = vrot.slane %v132, 4
    %v134 = vadd.f32 %v132, %v133
    %v135 = vrot.slane %v134, 2
    %v136 = vadd.f32 %v134, %v135
    %v137 = vrot.slane %v136, 1
    %v138 = vadd.f32 %v136, %v137
    %v139 = vadd.f32 %v97, %v98
    %v140 = vadd.f32 %v139, %v99
    %v141 = vadd.f32 %v140, %v100
    %v142 = vrot.slane %v141, 4
    %v143 = vadd.f32 %v141, %v142
    %v144 = vrot.slane %v143, 2
    %v145 = vadd.f32 %v143, %v144
    %v146 = vrot.slane %v145, 1
    %v147 = vadd.f32 %v145, %v146
    %v148 = vadd.f32 %v101, %v102
    %v149 = vadd.f32 %v148, %v103
    %v150 = vadd.f32 %v149, %v104
    %v151 = vrot.slane %v150, 4
    %v152 = vadd.f32 %v150, %v151
    %v153 = vrot.slane %v152, 2
    %v154 = vadd.f32 %v152, %v153
    %v155 = vrot.slane %v154, 1
    %v156 = vadd.f32 %v154, %v155
    %v157 = vadd.f32 %v105, %v106
    %v158 = vadd.f32 %v157, %v107
    %v159 = vadd.f32 %v158, %v108
    %v160 = vrot.slane %v159, 4
    %v161 = vadd.f32 %v159, %v160
    %v162 = vrot.slane %v161, 2
    %v163 = vadd.f32 %v161, %v162
    %v164 = vrot.slane %v163, 1
    %v165 = vadd.f32 %v163, %v164
    %v166 = vadd.f32 %v109, %v110
    %v167 = vadd.f32 %v166, %v111
    %v168 = vadd.f32 %v167, %v112
    %v169 = vrot.slane %v168, 4
    %v170 = vadd.f32 %v168, %v169
    %v171 = vrot.slane %v170, 2
    %v172 = vadd.f32 %v170, %v171
    %v173 = vrot.slane %v172, 1
    %v174 = vadd.f32 %v172, %v173
    %v175 = vadd.f32 %v113, %v114
    %v176 = vadd.f32 %v175, %v115
    %v177 = vadd.f32 %v176, %v116
    %v178 = vrot.slane %v177, 4
    %v179 = vadd.f32 %v177, %v178
    %v180 = vrot.slane %v179, 2
    %v181 = vadd.f32 %v179, %v180
    %v182 = vrot.slane %v181, 1
    %v183 = vadd.f32 %v181, %v182
    %v184 = vadd.f32 %v117, %v118
    %v185 = vadd.f32 %v184, %v119
    %v186 = vadd.f32 %v185, %v120
    %v187 = vrot.slane %v186, 4
    %v188 = vadd.f32 %v186, %v187
    %v189 = vrot.slane %v188, 2
    %v190 = vadd.f32 %v188, %v189
    %v191 = vrot.slane %v190, 1
    %v192 = vadd.f32 %v190, %v191
    %vm201 = vcmask 1041409
    %v202 = vsel %vm201, %v138, %v129
    %vm203 = vcmask 1042434
    %v204 = vsel %vm203, %v147, %v202
    %vm205 = vcmask 1043459
    %v206 = vsel %vm205, %v156, %v204
    %vm207 = vcmask 1044484
    %v208 = vsel %vm207, %v165, %v206
    %vm209 = vcmask 1045509
    %v210 = vsel %vm209, %v174, %v208
    %vm211 = vcmask 1046534
    %v212 = vsel %vm211, %v183, %v210
    %vm213 = vcmask 1047559
    %v214 = vsel %vm213, %v192, %v212
    %v216 = vadd.f32 %v52, %v214
    %217 = vst [vmem:[#allocation2] sm:$0xff] %v216
    // Predicated region
    $region26: #{tpu_custom_call.1} parent=1 // pred_check
      %p218 = pneg %p47
    $region27: #{tpu_custom_call.1} parent=1 // pred_check_branch
      %220 = sbr.rel (%p218) target = $region29
    $region28: #{tpu_custom_call.1} parent=1 // pred_region
      %v221 = vld [vmem:[#allocation2] sm:$0xff]
      %v222 = vld [vmem:[%s2] sm:$0x1]
      %v224 = vperm.slane %v222, 0
      %v226 = vadd.f32 %v221, %v224
      %227 = vst [vmem:[#allocation8] sm:$0xff] %v226
    $region29: #{tpu_custom_call.1} parent=1 // pred_fallthru
      _
    // Predicated region
    $region30: #{tpu_custom_call.1} parent=1 // pred_check
      _
    $region31: #{tpu_custom_call.1} parent=1 // pred_check_branch
      %229 = sbr.rel (0) target = $region33
    $region32: #{tpu_custom_call.1} parent=1 // pred_region
      %231 = vsyncadd [#allocation5], 0
      %s233 = sshll.u32 [#allocation8], 4
      %s234 = int_to_ptr.vmem [resolvable:$true] %s233
      %s235 = sshll.u32 %s3, 4
      %s236 = int_to_ptr.hbm [resolvable:$true] %s235
      %238 = dma.vmem_to_hbm [thread:$0]  %s234, 128, %s236, [#allocation5]
    $region33: #{tpu_custom_call.1} parent=1 // pred_fallthru
      _
    // Predicated region
    $region34: #{tpu_custom_call.1} parent=1 // pred_check
      _
    $region35: #{tpu_custom_call.1} parent=1 // pred_check_branch
      %240 = sbr.rel (0) target = $region37
    $region36: #{tpu_custom_call.1} parent=1 // pred_region
      %242 = dma.done [#allocation5], 128
    $region37: #{tpu_custom_call.1} parent=1 // pred_fallthru
      _
    %243 = vsyncpa [#allocation4], 1
    %244 = vsyncpa [#allocation7], 1
    %245 = vsyncpa [#allocation5], 1

</llo_original>
